<compile_context>
chip_gen: v6e
topology: v6e:2x2x1
jax: 0.10.0
libtpu: 0.0.40
codegen_flags: <defaults>
</compile_context>

<pallas_src>
import jax
import jax.numpy as jnp
from jax.experimental import pallas as pl
from jax.experimental.pallas import tpu as pltpu


def recommend_kernel(x_ref, w1_ref, b1_ref, w2_ref, b2_ref, o_ref):
    # fc1 + ReLU: MXU matmul (bf16 or f32 operands), f32 accumulation.
    h = jnp.dot(x_ref[...], w1_ref[...], preferred_element_type=jnp.float32)
    h = jnp.maximum(h + b1_ref[...], 0.0)

    # fc2: cast h back to the weight dtype so the MXU runs bf16 when enabled.
    logits = jnp.dot(h.astype(w2_ref.dtype), w2_ref[...],
                     preferred_element_type=jnp.float32) + b2_ref[...]

    # Softmax over the feature axis (dim=1 of the 2-D input), exact divide.
    m = jnp.max(logits, axis=-1, keepdims=True)
    e = jnp.exp(logits - m)
    s = jnp.sum(e, axis=-1, keepdims=True)
    o_ref[...] = (e / s).astype(o_ref.dtype)


def _round_up(n, m):
    return ((n + m - 1) // m) * m


def recommend_forward(x, w1, b1, w2, b2, *, tile_b=1024, use_bf16=True):
    """x: (B, in); w1: (in, hidden); b1: (1, hidden); w2: (hidden, out); b2: (1, out)."""
    B, in_size = x.shape
    hidden = w1.shape[1]
    out_size = w2.shape[1]

    # bf16 matmul operands halve streamed HBM bytes (v6e/v7x native bf16 MXU);
    # accumulation and softmax stay in f32 inside the kernel.
    if use_bf16:
        x = x.astype(jnp.bfloat16)
        w1 = w1.astype(jnp.bfloat16)
        w2 = w2.astype(jnp.bfloat16)
    b1 = b1.astype(jnp.float32)
    b2 = b2.astype(jnp.float32)

    # Batch tile: big enough to amortize per-grid-step overhead and keep DMA
    # efficient, multiple of 8 (sublane), and capped at ceil(B/2) so the grid
    # has >=2 blocks (v7x megacore).  VMEM footprint stays tiny (<1 MiB).
    tile_b = max(8, min(_round_up(tile_b, 8), _round_up(pl.cdiv(B, 2), 8)))
    grid = (pl.cdiv(B, tile_b),)  # partial last block is masked by Pallas

    x_bytes = jnp.dtype(x.dtype).itemsize
    w_bytes = jnp.dtype(w1.dtype).itemsize
    cost = pl.CostEstimate(
        flops=2 * B * (in_size * hidden + hidden * out_size),
        transcendentals=B * out_size,
        bytes_accessed=(B * in_size * x_bytes
                        + B * out_size * 4
                        + (in_size * hidden + hidden * out_size) * w_bytes
                        + (hidden + out_size) * 4),
    )

    return pl.pallas_call(
        recommend_kernel,
        out_shape=jax.ShapeDtypeStruct((B, out_size), jnp.float32),
        grid_spec=pltpu.PrefetchScalarGridSpec(
            num_scalar_prefetch=0,
            grid=grid,
            in_specs=[
                pl.BlockSpec((tile_b, in_size), lambda i: (i, 0)),    # x: streamed
                pl.BlockSpec((in_size, hidden), lambda i: (0, 0)),    # w1: resident
                pl.BlockSpec((1, hidden), lambda i: (0, 0)),          # b1: resident
                pl.BlockSpec((hidden, out_size), lambda i: (0, 0)),   # w2: resident
                pl.BlockSpec((1, out_size), lambda i: (0, 0)),        # b2: resident
            ],
            out_specs=pl.BlockSpec((tile_b, out_size), lambda i: (i, 0)),
        ),
        compiler_params=pltpu.CompilerParams(
            dimension_semantics=("parallel",),   # batch sharded across TCs on v7x
            vmem_limit_bytes=32 * 1024 * 1024,
        ),
        cost_estimate=cost,
    )(x, w1, b1, w2, b2)


if __name__ == "__main__":
    # Small shapes consistent with the module; batch=200 with the ceil(B/2)
    # tile cap gives a 2-block grid and exercises the masked partial block.
    batch, input_size, hidden_size, output_size = 200, 32, 64, 16

    key = jax.random.PRNGKey(0)
    kx, kw1, kb1, kw2, kb2 = jax.random.split(key, 5)

    x = jax.random.normal(kx, (batch, input_size), dtype=jnp.float32)

    # Deterministic synthetic parameters (PyTorch-like uniform init scale).
    lim1 = 1.0 / (input_size ** 0.5)
    lim2 = 1.0 / (hidden_size ** 0.5)
    w1 = jax.random.uniform(kw1, (input_size, hidden_size), jnp.float32, -lim1, lim1)
    b1 = jax.random.uniform(kb1, (1, hidden_size), jnp.float32, -lim1, lim1)
    w2 = jax.random.uniform(kw2, (hidden_size, output_size), jnp.float32, -lim2, lim2)
    b2 = jax.random.uniform(kb2, (1, output_size), jnp.float32, -lim2, lim2)

    out = recommend_forward(x, w1, b1, w2, b2, tile_b=1024, use_bf16=True)
    jax.block_until_ready(out)

    # Cross-check against the pure-f32 JAX reference.  bf16 matmul operands
    # introduce ~1e-3-level logit error -> probabilities agree to ~1e-3.
    ref = jax.nn.softmax(jnp.maximum(x @ w1 + b1, 0.0) @ w2 + b2, axis=1)
    assert out.shape == ref.shape
    assert jnp.allclose(out, ref, atol=2e-3, rtol=2e-3)
    # Rows are proper distributions (exact divide -> sums to 1 within f32 eps).
    assert jnp.allclose(jnp.sum(out, axis=1), 1.0, atol=1e-5)

    print("KERNEL_OK")
</pallas_src>

<mosaic_0001>
module attributes {stable_mosaic.version = 11 : i64} {
  func.func @recommend_kernel(%arg0: i32, %arg1: memref<104x32xbf16, #tpu.memory_space<vmem>>, %arg2: memref<32x64xbf16, #tpu.memory_space<vmem>>, %arg3: memref<1x64xf32, #tpu.memory_space<vmem>>, %arg4: memref<64x16xbf16, #tpu.memory_space<vmem>>, %arg5: memref<1x16xf32, #tpu.memory_space<vmem>>, %arg6: memref<104x16xf32, #tpu.memory_space<vmem>>) attributes {dimension_semantics = [#tpu.dimension_semantics<parallel>], iteration_bounds = array<i64: 2>, scalar_prefetch = 0 : i64, scratch_operands = 0 : i64, tpu.core_type = #tpu.core_type<tc>, window_params = [{transform_indices = @transform_0, window_bounds = array<i64: 104, 32>}, {pipeline_mode = #tpu.pipeline_mode<synchronous>, transform_indices = @transform_1, window_bounds = array<i64: 32, 64>}, {pipeline_mode = #tpu.pipeline_mode<synchronous>, transform_indices = @transform_2, window_bounds = array<i64: 1, 64>}, {pipeline_mode = #tpu.pipeline_mode<synchronous>, transform_indices = @transform_3, window_bounds = array<i64: 64, 16>}, {pipeline_mode = #tpu.pipeline_mode<synchronous>, transform_indices = @transform_4, window_bounds = array<i64: 1, 16>}, {transform_indices = @transform_5, window_bounds = array<i64: 104, 16>}]} {
    %c0 = arith.constant 0 : index
    %c0_0 = arith.constant 0 : index
    %0 = vector.load %arg1[%c0, %c0_0] : memref<104x32xbf16, #tpu.memory_space<vmem>>, vector<104x32xbf16>
    %c0_1 = arith.constant 0 : index
    %c0_2 = arith.constant 0 : index
    %1 = vector.load %arg2[%c0_1, %c0_2] : memref<32x64xbf16, #tpu.memory_space<vmem>>, vector<32x64xbf16>
    %cst = arith.constant dense<0.000000e+00> : vector<104x64xf32>
    %2 = tpu.matmul %0, %1, %cst {dimension_numbers = #tpu.dot_dimension_numbers<[1], [0], [0], [1], [0, 0, 1, 1], [], []>} : vector<104x32xbf16>, vector<32x64xbf16>, vector<104x64xf32> -> vector<104x64xf32>
    %c0_3 = arith.constant 0 : index
    %c0_4 = arith.constant 0 : index
    %3 = vector.load %arg3[%c0_3, %c0_4] : memref<1x64xf32, #tpu.memory_space<vmem>>, vector<1x64xf32>
    %4 = vector.broadcast %3 : vector<1x64xf32> to vector<104x64xf32>
    %5 = arith.addf %2, %4 : vector<104x64xf32>
    %cst_5 = arith.constant 0.000000e+00 : f32
    %6 = vector.broadcast %cst_5 : f32 to vector<104x64xf32>
    %7 = arith.maximumf %5, %6 : vector<104x64xf32>
    %8 = arith.truncf %7 : vector<104x64xf32> to vector<104x64xbf16>
    %c0_6 = arith.constant 0 : index
    %c0_7 = arith.constant 0 : index
    %9 = vector.load %arg4[%c0_6, %c0_7] : memref<64x16xbf16, #tpu.memory_space<vmem>>, vector<64x16xbf16>
    %cst_8 = arith.constant dense<0.000000e+00> : vector<104x16xf32>
    %10 = tpu.matmul %8, %9, %cst_8 {dimension_numbers = #tpu.dot_dimension_numbers<[1], [0], [0], [1], [0, 0, 1, 1], [], []>} : vector<104x64xbf16>, vector<64x16xbf16>, vector<104x16xf32> -> vector<104x16xf32>
    %c0_9 = arith.constant 0 : index
    %c0_10 = arith.constant 0 : index
    %11 = vector.load %arg5[%c0_9, %c0_10] : memref<1x16xf32, #tpu.memory_space<vmem>>, vector<1x16xf32>
    %12 = vector.broadcast %11 : vector<1x16xf32> to vector<104x16xf32>
    %13 = arith.addf %10, %12 : vector<104x16xf32>
    %cst_11 = arith.constant dense<0xFF800000> : vector<104xf32>
    %14 = vector.multi_reduction <maximumf>, %13, %cst_11 [1] : vector<104x16xf32> to vector<104xf32>
    %15 = vector.shape_cast %14 : vector<104xf32> to vector<104x1xf32>
    %16 = vector.broadcast %15 : vector<104x1xf32> to vector<104x16xf32>
    %17 = arith.subf %13, %16 : vector<104x16xf32>
    %18 = math.exp %17 : vector<104x16xf32>
    %cst_12 = arith.constant dense<0.000000e+00> : vector<104xf32>
    %19 = vector.multi_reduction <add>, %18, %cst_12 [1] : vector<104x16xf32> to vector<104xf32>
    %20 = vector.shape_cast %19 : vector<104xf32> to vector<104x1xf32>
    %21 = vector.broadcast %20 : vector<104x1xf32> to vector<104x16xf32>
    %22 = arith.divf %18, %21 : vector<104x16xf32>
    %c0_13 = arith.constant 0 : index
    %c0_14 = arith.constant 0 : index
    %23 = vector.load %arg6[%c0_13, %c0_14] : memref<104x16xf32, #tpu.memory_space<vmem>>, vector<104x16xf32>
    tpu.vector_store %arg6[%c0_13, %c0_14], %22 {strides = array<i32>} : memref<104x16xf32, #tpu.memory_space<vmem>>, vector<104x16xf32>,
    return
  }
  func.func @transform_0(%arg0: i32) -> (i32, i32) {
    %c0_i32 = arith.constant 0 : i32
    %c0_i32_0 = arith.constant 0 : i32
    return %arg0, %c0_i32 : i32, i32
  }
  func.func @transform_1(%arg0: i32) -> (i32, i32) {
    %c0_i32 = arith.constant 0 : i32
    %c0_i32_0 = arith.constant 0 : i32
    %c0_i32_1 = arith.constant 0 : i32
    return %c0_i32, %c0_i32_0 : i32, i32
  }
  func.func @transform_2(%arg0: i32) -> (i32, i32) {
    %c0_i32 = arith.constant 0 : i32
    %c0_i32_0 = arith.constant 0 : i32
    %c0_i32_1 = arith.constant 0 : i32
    return %c0_i32, %c0_i32_0 : i32, i32
  }
  func.func @transform_3(%arg0: i32) -> (i32, i32) {
    %c0_i32 = arith.constant 0 : i32
    %c0_i32_0 = arith.constant 0 : i32
    %c0_i32_1 = arith.constant 0 : i32
    return %c0_i32, %c0_i32_0 : i32, i32
  }
  func.func @transform_4(%arg0: i32) -> (i32, i32) {
    %c0_i32 = arith.constant 0 : i32
    %c0_i32_0 = arith.constant 0 : i32
    %c0_i32_1 = arith.constant 0 : i32
    return %c0_i32, %c0_i32_0 : i32, i32
  }
  func.func @transform_5(%arg0: i32) -> (i32, i32) {
    %c0_i32 = arith.constant 0 : i32
    %c0_i32_0 = arith.constant 0 : i32
    return %arg0, %c0_i32 : i32, i32
  }
}

</mosaic_0001>

<llo_original>
// kernel: tpu_custom_call.1
$region0: #{tpu_custom_call.1}
  #allocation0 [shape = 'u32[]', space=smem, size = 0x4, offset = 0x4, fixed_abs, tag = 'smem constant byte address 0x4 - core index']
  #allocation1 [shape = 'u32[144,128]{1,0:T(1,128)}', space=vmem, size = 0x12000, scoped, tag = 'internal scratch']
  %s0 = inlined_call_operand.vmem [shape: bf16[200,32], index: 0, kind: input, shape index: {}]
  %s1 = inlined_call_operand.vmem [shape: bf16[32,64], index: 1, kind: input, shape index: {}]
  %s2 = inlined_call_operand.vmem [shape: f32[1,64], index: 2, kind: input, shape index: {}]
  %s3 = inlined_call_operand.vmem [shape: bf16[64,16], index: 3, kind: input, shape index: {}]
  %s4 = inlined_call_operand.vmem [shape: f32[1,16], index: 4, kind: input, shape index: {}]
  %s5 = inlined_call_operand.vmem [shape: f32[200,16], index: 5, kind: output, shape index: {}]
  %s6 = sld [smem:[#allocation0]]
  $region101: #{tpu_custom_call.1} parent=0
    _
  %s8 = ssub.s32 1, %s6
  %s9 = scalar_select 0, %s8, %s6
  $region1: #{tpu_custom_call.1} parent=0
    #allocation2 [shape = 'u8[106496]{0}', space=vmem, size = 0x1a000, scoped, tag = 'output window, operand 0']
    loop: start=0, step=1, limit=4
    $region2: #{tpu_custom_call.1} parent=1 // loop_pre_header
      _
    $region3: #{tpu_custom_call.1} parent=1 // loop_header
      %s11 = sphi 0, %s15
      %p12 = scmp.ge.s32.totalorder %s11, 4
      %s21 = sphi 0, %s23
      %s24 = sphi 0, %s21
      %s25 = sphi 0, %s24
      %s41 = sphi 0, %s25
      %s45 = sphi 0, %s45
      %s47 = sphi 0, %s45
      %s48 = sphi 0, %s47
      %s62 = sphi 0, %s48
      %s66 = sphi 0, %s66
      %s68 = sphi 0, %s66
      %s69 = sphi 0, %s68
      %s83 = sphi 0, %s69
      %s87 = sphi 0, %s87
      %s89 = sphi 0, %s87
      %s90 = sphi 0, %s89
      %s104 = sphi 0, %s90
      %s108 = sphi 0, %s108
      %s110 = sphi 0, %s108
      %s111 = sphi 0, %s110
      %s125 = sphi 0, %s111
      %s131 = sphi 0, %s133
      %s134 = sphi 0, %s131
      %s135 = sphi 0, %s134
      %s151 = sphi 0, %s135
    $region4: #{tpu_custom_call.1} parent=1 // loop_header_branch
      %14 = sbr.rel (%p12) target = $region8
    $region5: #{tpu_custom_call.1} parent=1 // loop_body
      %s16 = ssub.s32 %s11, 1
      %s17 = ssub.s32 %s11, 2
      %s18 = sadd.s32 %s11, 1
      %s19 = ssub.s32 %s11, %s18
      %p20 = scmp.eq.s32.totalorder %s19, 0
      %s22 = sadd.s32 %s21, 1
      %s23 = scalar_select %p20, %s21, %s22
      %p26 = pneg %p20
      %p27 = scmp.eq.s32.totalorder %s11, 1
      %p28 = por %p26, %p27
      %p29 = scmp.ne.s32.totalorder %s21, %s24
      %p30 = scmp.eq.s32.totalorder %s11, 0
      %p31 = por %p29, %p30
      %p32 = scmp.ne.s32.totalorder %s21, %s24
      %p33 = scmp.eq.s32.totalorder %s16, 1
      %p34 = por %p32, %p33
      %p35 = scmp.ne.s32.totalorder %s24, %s25
      %p36 = scmp.eq.s32.totalorder %s16, 0
      %p37 = por %p35, %p36
      %p38 = scmp.ne.s32.totalorder %s24, %s25
      %p39 = scmp.eq.s32.totalorder %s17, 1
      %p40 = por %p38, %p39
      %p42 = scmp.ne.s32.totalorder %s25, %s41
      %p43 = scmp.eq.s32.totalorder %s17, 0
      %p44 = por %p42, %p43
      %s46 = sadd.s32 %s45, 1
      %p49 = scmp.eq.s32.totalorder %s11, 1
      %p50 = scmp.ne.s32.totalorder %s45, %s47
      %p51 = scmp.eq.s32.totalorder %s11, 0
      %p52 = por %p50, %p51
      %p53 = scmp.ne.s32.totalorder %s45, %s47
      %p54 = scmp.eq.s32.totalorder %s16, 1
      %p55 = por %p53, %p54
      %p56 = scmp.ne.s32.totalorder %s47, %s48
      %p57 = scmp.eq.s32.totalorder %s16, 0
      %p58 = por %p56, %p57
      %p59 = scmp.ne.s32.totalorder %s47, %s48
      %p60 = scmp.eq.s32.totalorder %s17, 1
      %p61 = por %p59, %p60
      %p63 = scmp.ne.s32.totalorder %s48, %s62
      %p64 = scmp.eq.s32.totalorder %s17, 0
      %p65 = por %p63, %p64
      %s67 = sadd.s32 %s66, 1
      %p70 = scmp.eq.s32.totalorder %s11, 1
      %p71 = scmp.ne.s32.totalorder %s66, %s68
      %p72 = scmp.eq.s32.totalorder %s11, 0
      %p73 = por %p71, %p72
      %p74 = scmp.ne.s32.totalorder %s66, %s68
      %p75 = scmp.eq.s32.totalorder %s16, 1
      %p76 = por %p74, %p75
      %p77 = scmp.ne.s32.totalorder %s68, %s69
      %p78 = scmp.eq.s32.totalorder %s16, 0
      %p79 = por %p77, %p78
      %p80 = scmp.ne.s32.totalorder %s68, %s69
      %p81 = scmp.eq.s32.totalorder %s17, 1
      %p82 = por %p80, %p81
      %p84 = scmp.ne.s32.totalorder %s69, %s83
      %p85 = scmp.eq.s32.totalorder %s17, 0
      %p86 = por %p84, %p85
      %s88 = sadd.s32 %s87, 1
      %p91 = scmp.eq.s32.totalorder %s11, 1
      %p92 = scmp.ne.s32.totalorder %s87, %s89
      %p93 = scmp.eq.s32.totalorder %s11, 0
      %p94 = por %p92, %p93
      %p95 = scmp.ne.s32.totalorder %s87, %s89
      %p96 = scmp.eq.s32.totalorder %s16, 1
      %p97 = por %p95, %p96
      %p98 = scmp.ne.s32.totalorder %s89, %s90
      %p99 = scmp.eq.s32.totalorder %s16, 0
      %p100 = por %p98, %p99
      %p101 = scmp.ne.s32.totalorder %s89, %s90
      %p102 = scmp.eq.s32.totalorder %s17, 1
      %p103 = por %p101, %p102
      %p105 = scmp.ne.s32.totalorder %s90, %s104
      %p106 = scmp.eq.s32.totalorder %s17, 0
      %p107 = por %p105, %p106
      %s109 = sadd.s32 %s108, 1
      %p112 = scmp.eq.s32.totalorder %s11, 1
      %p113 = scmp.ne.s32.totalorder %s108, %s110
      %p114 = scmp.eq.s32.totalorder %s11, 0
      %p115 = por %p113, %p114
      %p116 = scmp.ne.s32.totalorder %s108, %s110
      %p117 = scmp.eq.s32.totalorder %s16, 1
      %p118 = por %p116, %p117
      %p119 = scmp.ne.s32.totalorder %s110, %s111
      %p120 = scmp.eq.s32.totalorder %s16, 0
      %p121 = por %p119, %p120
      %p122 = scmp.ne.s32.totalorder %s110, %s111
      %p123 = scmp.eq.s32.totalorder %s17, 1
      %p124 = por %p122, %p123
      %p126 = scmp.ne.s32.totalorder %s111, %s125
      %p127 = scmp.eq.s32.totalorder %s17, 0
      %p128 = por %p126, %p127
      %s129 = ssub.s32 %s11, %s18
      %p130 = scmp.eq.s32.totalorder %s129, 0
      %s132 = sadd.s32 %s131, 1
      %s133 = scalar_select %p130, %s131, %s132
      %p136 = pneg %p130
      %p137 = scmp.eq.s32.totalorder %s11, 1
      %p138 = por %p136, %p137
      %p139 = scmp.ne.s32.totalorder %s131, %s134
      %p140 = scmp.eq.s32.totalorder %s11, 0
      %p141 = por %p139, %p140
      %p142 = scmp.ne.s32.totalorder %s131, %s134
      %p143 = scmp.eq.s32.totalorder %s16, 1
      %p144 = por %p142, %p143
      %p145 = scmp.ne.s32.totalorder %s134, %s135
      %p146 = scmp.eq.s32.totalorder %s16, 0
      %p147 = por %p145, %p146
      %p148 = scmp.ne.s32.totalorder %s134, %s135
      %p149 = scmp.eq.s32.totalorder %s17, 1
      %p150 = por %p148, %p149
      %p152 = scmp.ne.s32.totalorder %s135, %s151
      %p153 = scmp.eq.s32.totalorder %s17, 0
      %p154 = por %p152, %p153
      %p155 = scmp.le.s32.totalorder 1, %s11
      %p156 = scmp.lt.s32.totalorder %s11, 3
      %p157 = pnand %p155, %p156
      %p158 = pneg %p157
      // Predicated region
      $region9: #{tpu_custom_call.1} parent=5 // pred_check
        _
      $region10: #{tpu_custom_call.1} parent=5 // pred_check_branch
        %160 = sbr.rel (%p157) target = $region12
      $region11: #{tpu_custom_call.1} parent=5 // pred_region
        %s161 = ssub.s32 %s11, 1
        // Predicated region
        $region13: #{tpu_custom_call.1} parent=11 // pred_check
          %p162 = pneg %p58
        $region14: #{tpu_custom_call.1} parent=11 // pred_check_branch
          %164 = sbr.rel (%p162) target = $region16
        $region15: #{tpu_custom_call.1} parent=11 // pred_region
          _
        $region16: #{tpu_custom_call.1} parent=11 // pred_fallthru
          _
        // Predicated region
        $region17: #{tpu_custom_call.1} parent=11 // pred_check
          %p165 = pneg %p79
        $region18: #{tpu_custom_call.1} parent=11 // pred_check_branch
          %167 = sbr.rel (%p165) target = $region20
        $region19: #{tpu_custom_call.1} parent=11 // pred_region
          _
        $region20: #{tpu_custom_call.1} parent=11 // pred_fallthru
          _
        // Predicated region
        $region21: #{tpu_custom_call.1} parent=11 // pred_check
          %p168 = pneg %p100
        $region22: #{tpu_custom_call.1} parent=11 // pred_check_branch
          %170 = sbr.rel (%p168) target = $region24
        $region23: #{tpu_custom_call.1} parent=11 // pred_region
          _
        $region24: #{tpu_custom_call.1} parent=11 // pred_fallthru
          _
        // Predicated region
        $region25: #{tpu_custom_call.1} parent=11 // pred_check
          %p171 = pneg %p121
        $region26: #{tpu_custom_call.1} parent=11 // pred_check_branch
          %173 = sbr.rel (%p171) target = $region28
        $region27: #{tpu_custom_call.1} parent=11 // pred_region
          _
        $region28: #{tpu_custom_call.1} parent=11 // pred_fallthru
          _
      $region12: #{tpu_custom_call.1} parent=5 // pred_fallthru
        _
      %p174 = scmp.lt.s32.totalorder %s11, 2
      // Predicated region
      $region29: #{tpu_custom_call.1} parent=5 // pred_check
        %p175 = pneg %p174
      $region30: #{tpu_custom_call.1} parent=5 // pred_check_branch
        %177 = sbr.rel (%p175) target = $region32
      $region31: #{tpu_custom_call.1} parent=5 // pred_region
        // Predicated region
        $region33: #{tpu_custom_call.1} parent=31 // pred_check
          %p178 = pneg %p31
        $region34: #{tpu_custom_call.1} parent=31 // pred_check_branch
          %180 = sbr.rel (%p178) target = $region36
        $region35: #{tpu_custom_call.1} parent=31 // pred_region
          %s181 = smul.u32 13, %s11
          %s182 = ssub.s32 25, %s181
          %p183 = scmp.lt.s32.totalorder %s182, 13
          %s184 = scalar_select %p183, %s182, 13
          %s185 = smul.u32 64, %s184
          %p186 = scmp.lt.s32.totalorder %s181, 24
          %s187 = scalar_select %p186, %s181, 24
          %s188 = smul.addr %s187, 4
          %s189 = scalar_lea.vmem %s0, %s188
          %s190 = smul.u32 13, %s11
          %s191 = ssub.s32 25, %s190
          %p192 = scmp.lt.s32.totalorder %s191, 13
          %s193 = scalar_select %p192, %s191, 13
          %s194 = smul.u32 64, %s193
        $region36: #{tpu_custom_call.1} parent=31 // pred_fallthru
          _
      $region32: #{tpu_custom_call.1} parent=5 // pred_fallthru
        _
      %p195 = scmp.le.s32.totalorder 1, %s11
      %p196 = scmp.lt.s32.totalorder %s11, 3
      %p197 = pnand %p195, %p196
      %p198 = pneg %p197
      // Predicated region
      $region37: #{tpu_custom_call.1} parent=5 // pred_check
        _
      $region38: #{tpu_custom_call.1} parent=5 // pred_check_branch
        %200 = sbr.rel (%p197) target = $region40
      $region39: #{tpu_custom_call.1} parent=5 // pred_region
        %s201 = ssub.s32 %s11, 1
        %s202 = smul.u32 13, %s16
        %s203 = ssub.s32 25, %s202
        %p204 = scmp.lt.s32.totalorder %s203, 13
        %s205 = scalar_select %p204, %s203, 13
        %s206 = smul.u32 64, %s205
        %p207 = scmp.lt.s32.totalorder %s202, 24
        %s208 = scalar_select %p207, %s202, 24
        %s209 = smul.addr %s208, 4
        %s210 = scalar_lea.vmem %s0, %s209
        %p211 = pneg %p37
        %p212 = pneg %p34
        %p213 = pneg %p58
        %p214 = pneg %p55
        %p215 = pneg %p79
        %p216 = pneg %p76
        %p217 = pneg %p100
        %p218 = pneg %p97
        %p219 = pneg %p121
        %p220 = pneg %p118
        %p221 = pneg %p147
        %p222 = pneg %p144
        %s223 = sand.u32 %s134, 1
        %s224 = sand.u32 %s134, 1
        %s225 = smul.addr %s224, 104
        %s226 = scalar_lea.vmem [#allocation2], %s225
        %s227 = smul.u32 13, %s16
        %s228 = ssub.s32 25, %s227
        %p229 = scmp.lt.s32.totalorder %s228, 13
        %s230 = scalar_select %p229, %s228, 13
        %s231 = smul.u32 64, %s230
        %p232 = scmp.lt.s32.totalorder %s227, 24
        %s233 = scalar_select %p232, %s227, 24
        %s234 = smul.addr %s233, 4
        %s235 = scalar_lea.vmem %s0, %s234
        %s236 = smul.u32 13, %s16
        %s237 = ssub.s32 25, %s236
        %p238 = scmp.lt.s32.totalorder %s237, 13
        %s239 = scalar_select %p238, %s237, 13
        %s240 = smul.u32 64, %s239
        %s241 = smul.u32 13, %s16
        %s242 = ssub.s32 25, %s241
        %p243 = scmp.lt.s32.totalorder %s242, 13
        %s244 = scalar_select %p243, %s242, 13
        %s245 = smul.u32 128, %s244
        %v247 = vld [vmem:[%s235] sm:$0xf]
        %v248 = vld [vmem:[%s235 + $0x4] sm:$0xf]
        %v249 = vld [vmem:[%s235 + $0x8] sm:$0xf]
        %v250 = vld [vmem:[%s235 + $0xc] sm:$0xf]
        %v251 = vld [vmem:[%s235 + $0x10] sm:$0xf]
        %v252 = vld [vmem:[%s235 + $0x14] sm:$0xf]
        %v253 = vld [vmem:[%s235 + $0x18] sm:$0xf]
        %v254 = vld [vmem:[%s235 + $0x1c] sm:$0xf]
        %v255 = vld [vmem:[%s235 + $0x20] sm:$0xf]
        %v256 = vld [vmem:[%s235 + $0x24] sm:$0xf]
        %v257 = vld [vmem:[%s235 + $0x28] sm:$0xf]
        %v258 = vld [vmem:[%s235 + $0x2c] sm:$0xf]
        %v259 = vld [vmem:[%s235 + $0x30] sm:$0xf]
        %v260 = vld [vmem:[%s1] sm:$0xf]
        %v261 = vld [vmem:[%s1 + $0x4] sm:$0xf]
        %v262 = vld [vmem:[%s1 + $0x8] sm:$0xf]
        %v263 = vld [vmem:[%s1 + $0xc] sm:$0xf]
        %v264 = vld [vmem:[%s2] sm:$0x1]
        %v266 = vlaneseq
        %v267 = vshrl.u32 %v266, 7
        %v268 = vsub.s32 0, %v267
        %v269 = vrot.slane %v264, %v268
        %v284 = vunpack.c.l.b16 %v247
        %v285 = vunpack.c.l.b16 %v248
        %v286 = vunpack.c.l.b16 %v249
        %v287 = vunpack.c.l.b16 %v250
        %v288 = vunpack.c.l.b16 %v251
        %v289 = vunpack.c.l.b16 %v252
        %v290 = vunpack.c.l.b16 %v253
        %v291 = vunpack.c.l.b16 %v254
        %v292 = vunpack.c.l.b16 %v255
        %v293 = vunpack.c.l.b16 %v256
        %v294 = vunpack.c.l.b16 %v257
        %v295 = vunpack.c.l.b16 %v258
        %v296 = vunpack.c.l.b16 %v259
        %v297 = vpack.c.b16 %v285, %v284
        %v298 = vpack.c.b16 %v287, %v286
        %v299 = vpack.c.b16 %v289, %v288
        %v300 = vpack.c.b16 %v291, %v290
        %v301 = vpack.c.b16 %v293, %v292
        %v302 = vpack.c.b16 %v295, %v294
        %v303 = vpack.c.b16 %v296, %v296
        %v308 = vunpack.c.l.b16 %v260
        %v309 = vunpack.c.l.b16 %v261
        %v310 = vunpack.c.l.b16 %v262
        %v311 = vunpack.c.l.b16 %v263
        %v312 = vpack.c.b16 %v309, %v308
        %v313 = vpack.c.b16 %v311, %v310
        %vm316 = vcmask 261120
        %v318 = vsel %vm316, %v297, 0
        %v321 = vsel %vm316, %v298, 0
        %v324 = vsel %vm316, %v299, 0
        %v327 = vsel %vm316, %v300, 0
        %v330 = vsel %vm316, %v301, 0
        %v333 = vsel %vm316, %v302, 0
        %v336 = vsel %vm316, %v303, 0
        %338 = vmatprep.subr.bf16.mxu0 0
        %339 = vmatpush1.bf16.msra.mxu0 0
        %340 = vmatprep.subr.bf16.mxu0 0
        %341 = vmatpush1.bf16.msra.mxu0 0
        %342 = vmatprep.subr.bf16.mxu0 0
        %343 = vmatpush1.bf16.msra.mxu0 0
        %344 = vmatprep.subr.bf16.mxu0 0
        %345 = vmatpush1.bf16.msra.mxu0 0
        %346 = vmatprep.subr.bf16.mxu0 0
        %347 = vmatpush1.bf16.msra.mxu0 0
        %348 = vmatprep.subr.bf16.mxu0 0
        %349 = vmatpush1.bf16.msra.mxu0 0
        %350 = vmatprep.subr.bf16.mxu0 0
        %351 = vmatpush1.bf16.msra.mxu0 %v313
        %352 = vmatprep.subr.bf16.mxu0 0
        %353 = vmatpush1.bf16.msra.mxu0 %v312
        %354 = vmatprep.subr.bf16.mxu0 0
        %355 = vmatpush2.bf16.msra.mxu0 0
        %356 = vmatprep.subr.bf16.mxu0 0
        %357 = vmatpush2.bf16.msra.mxu0 0
        %358 = vmatprep.subr.bf16.mxu0 0
        %359 = vmatpush2.bf16.msra.mxu0 0
        %360 = vmatprep.subr.bf16.mxu0 0
        %361 = vmatpush2.bf16.msra.mxu0 0
        %362 = vmatprep.subr.bf16.mxu0 0
        %363 = vmatpush2.bf16.msra.mxu0 0
        %364 = vmatprep.subr.bf16.mxu0 0
        %365 = vmatpush2.bf16.msra.mxu0 0
        %366 = vmatprep.subr.bf16.mxu0 0
        %367 = vmatpush2.bf16.msra.mxu0 0
        %368 = vmatprep.subr.bf16.mxu0 0
        %369 = vmatpush2.bf16.msra.mxu0 0
        %370 = vmatprep.mubr.bf16.mxu0 0
        %371 = vmatmul.mubr.bf16.gmra.mxu0 %v318
        %v372 = vpop.f32.mrf.mxu0
        %v373 = vadd.f32 %v269, %v372
        %v374 = vpop.f32.mrf.mxu0
        %v375 = vpop.f32.mrf.mxu0
        %v376 = vadd.f32 %v269, %v375
        %v377 = vpop.f32.mrf.mxu0
        %378 = vmatprep.mubr.bf16.mxu0 0
        %379 = vmatmul.mubr.bf16.gmra.mxu0 %v321
        %v380 = vpop.f32.mrf.mxu0
        %v381 = vadd.f32 %v269, %v380
        %v382 = vpop.f32.mrf.mxu0
        %v383 = vpop.f32.mrf.mxu0
        %v384 = vadd.f32 %v269, %v383
        %v385 = vpop.f32.mrf.mxu0
        %386 = vmatprep.mubr.bf16.mxu0 0
        %387 = vmatmul.mubr.bf16.gmra.mxu0 %v324
        %v388 = vpop.f32.mrf.mxu0
        %v389 = vadd.f32 %v269, %v388
        %v390 = vpop.f32.mrf.mxu0
        %v391 = vpop.f32.mrf.mxu0
        %v392 = vadd.f32 %v269, %v391
        %v393 = vpop.f32.mrf.mxu0
        %394 = vmatprep.mubr.bf16.mxu0 0
        %395 = vmatmul.mubr.bf16.gmra.mxu0 %v327
        %v396 = vpop.f32.mrf.mxu0
        %v397 = vadd.f32 %v269, %v396
        %v398 = vpop.f32.mrf.mxu0
        %v399 = vpop.f32.mrf.mxu0
        %v400 = vadd.f32 %v269, %v399
        %v401 = vpop.f32.mrf.mxu0
        %402 = vmatprep.mubr.bf16.mxu0 0
        %403 = vmatmul.mubr.bf16.gmra.mxu0 %v330
        %v404 = vpop.f32.mrf.mxu0
        %v405 = vadd.f32 %v269, %v404
        %v406 = vpop.f32.mrf.mxu0
        %v407 = vpop.f32.mrf.mxu0
        %v408 = vadd.f32 %v269, %v407
        %v409 = vpop.f32.mrf.mxu0
        %410 = vmatprep.mubr.bf16.mxu0 0
        %411 = vmatmul.mubr.bf16.gmra.mxu0 %v333
        %v412 = vpop.f32.mrf.mxu0
        %v413 = vadd.f32 %v269, %v412
        %v414 = vpop.f32.mrf.mxu0
        %v415 = vpop.f32.mrf.mxu0
        %v416 = vadd.f32 %v269, %v415
        %v417 = vpop.f32.mrf.mxu0
        %418 = vmatprep.mubr.bf16.mxu0 0
        %419 = vmatmul.mubr.bf16.gmra.mxu0 %v336
        %v420 = vpop.f32.mrf.mxu0
        %v421 = vadd.f32 %v269, %v420
        %v422 = vpop.f32.mrf.mxu0
        %v423 = vpop.f32.mrf.mxu0
        %v424 = vpop.f32.mrf.mxu0
        %425 = vdwg.mxu0
        %v426 = vmax.f32 %v373, 0.0
        %v427 = vmax.f32 %v376, 0.0
        %v428 = vmax.f32 %v381, 0.0
        %v429 = vmax.f32 %v384, 0.0
        %v430 = vmax.f32 %v389, 0.0
        %v431 = vmax.f32 %v392, 0.0
        %v432 = vmax.f32 %v397, 0.0
        %v433 = vmax.f32 %v400, 0.0
        %v434 = vmax.f32 %v405, 0.0
        %v435 = vmax.f32 %v408, 0.0
        %v436 = vmax.f32 %v413, 0.0
        %v437 = vmax.f32 %v416, 0.0
        %v438 = vmax.f32 %v421, 0.0
        %v439 = vpack.c.bf16 %v427, %v426
        %v440 = vpack.c.bf16 %v429, %v428
        %v441 = vpack.c.bf16 %v431, %v430
        %v442 = vpack.c.bf16 %v433, %v432
        %v443 = vpack.c.bf16 %v435, %v434
        %v444 = vpack.c.bf16 %v437, %v436
        %v445 = vpack.c.bf16 %v438, %v438
        %v446 = vld [vmem:[%s3] sm:$0xf]
        %v447 = vld [vmem:[%s3 + $0x4] sm:$0xf]
        %v448 = vld [vmem:[%s3 + $0x8] sm:$0xf]
        %v449 = vld [vmem:[%s3 + $0xc] sm:$0xf]
        %v450 = vld [vmem:[%s3 + $0x10] sm:$0xf]
        %v451 = vld [vmem:[%s3 + $0x14] sm:$0xf]
        %v452 = vld [vmem:[%s3 + $0x18] sm:$0xf]
        %v453 = vld [vmem:[%s3 + $0x1c] sm:$0xf]
        %v454 = vld [vmem:[%s4] sm:$0x1]
        %v456 = vlaneseq
        %v457 = vshrl.u32 %v456, 7
        %v458 = vsub.s32 0, %v457
        %v459 = vrot.slane %v454, %v458
        %v469 = vunpack.c.l.b16 %v446
        %v470 = vunpack.c.l.b16 %v447
        %v471 = vunpack.c.l.b16 %v448
        %v472 = vunpack.c.l.b16 %v449
        %v473 = vunpack.c.l.b16 %v450
        %v474 = vunpack.c.l.b16 %v451
        %v475 = vunpack.c.l.b16 %v452
        %v476 = vunpack.c.l.b16 %v453
        %v477 = vpack.c.b16 %v470, %v469
        %v478 = vpack.c.b16 %v472, %v471
        %v479 = vpack.c.b16 %v474, %v473
        %v480 = vpack.c.b16 %v476, %v475
        %vm485 = vcmask 523264
        %v487 = vsel %vm485, %v439, 0
        %v490 = vsel %vm485, %v440, 0
        %v493 = vsel %vm485, %v441, 0
        %v496 = vsel %vm485, %v442, 0
        %v499 = vsel %vm485, %v443, 0
        %v502 = vsel %vm485, %v444, 0
        %v505 = vsel %vm485, %v445, 0
        %507 = vmatprep.subr.bf16.mxu0 0
        %508 = vmatpush1.bf16.msra.mxu0 0
        %509 = vmatprep.subr.bf16.mxu0 0
        %510 = vmatpush1.bf16.msra.mxu0 0
        %511 = vmatprep.subr.bf16.mxu0 0
        %512 = vmatpush1.bf16.msra.mxu0 0
        %513 = vmatprep.subr.bf16.mxu0 0
        %514 = vmatpush1.bf16.msra.mxu0 0
        %515 = vmatprep.subr.bf16.mxu0 0
        %516 = vmatpush1.bf16.msra.mxu0 %v480
        %517 = vmatprep.subr.bf16.mxu0 0
        %518 = vmatpush1.bf16.msra.mxu0 %v479
        %519 = vmatprep.subr.bf16.mxu0 0
        %520 = vmatpush1.bf16.msra.mxu0 %v478
        %521 = vmatprep.subr.bf16.mxu0 0
        %522 = vmatpush1.bf16.msra.mxu0 %v477
        %523 = vmatprep.subr.bf16.mxu0 0
        %524 = vmatpush2.bf16.msra.mxu0 0
        %525 = vmatprep.subr.bf16.mxu0 0
        %526 = vmatpush2.bf16.msra.mxu0 0
        %527 = vmatprep.subr.bf16.mxu0 0
        %528 = vmatpush2.bf16.msra.mxu0 0
        %529 = vmatprep.subr.bf16.mxu0 0
        %530 = vmatpush2.bf16.msra.mxu0 0
        %531 = vmatprep.subr.bf16.mxu0 0
        %532 = vmatpush2.bf16.msra.mxu0 0
        %533 = vmatprep.subr.bf16.mxu0 0
        %534 = vmatpush2.bf16.msra.mxu0 0
        %535 = vmatprep.subr.bf16.mxu0 0
        %536 = vmatpush2.bf16.msra.mxu0 0
        %537 = vmatprep.subr.bf16.mxu0 0
        %538 = vmatpush2.bf16.msra.mxu0 0
        %539 = vmatprep.mubr.bf16.mxu0 0
        %540 = vmatmul.mubr.bf16.gmra.mxu0 %v487
        %v541 = vpop.f32.mrf.mxu0
        %v542 = vadd.f32 %v459, %v541
        %v543 = vpop.f32.mrf.mxu0
        %v544 = vpop.f32.mrf.mxu0
        %v545 = vadd.f32 %v459, %v544
        %v546 = vpop.f32.mrf.mxu0
        %547 = vmatprep.mubr.bf16.mxu0 0
        %548 = vmatmul.mubr.bf16.gmra.mxu0 %v490
        %v549 = vpop.f32.mrf.mxu0
        %v550 = vadd.f32 %v459, %v549
        %v551 = vpop.f32.mrf.mxu0
        %v552 = vpop.f32.mrf.mxu0
        %v553 = vadd.f32 %v459, %v552
        %v554 = vpop.f32.mrf.mxu0
        %555 = vmatprep.mubr.bf16.mxu0 0
        %556 = vmatmul.mubr.bf16.gmra.mxu0 %v493
        %v557 = vpop.f32.mrf.mxu0
        %v558 = vadd.f32 %v459, %v557
        %v559 = vpop.f32.mrf.mxu0
        %v560 = vpop.f32.mrf.mxu0
        %v561 = vadd.f32 %v459, %v560
        %v562 = vpop.f32.mrf.mxu0
        %563 = vmatprep.mubr.bf16.mxu0 0
        %564 = vmatmul.mubr.bf16.gmra.mxu0 %v496
        %v565 = vpop.f32.mrf.mxu0
        %v566 = vadd.f32 %v459, %v565
        %v567 = vpop.f32.mrf.mxu0
        %v568 = vpop.f32.mrf.mxu0
        %v569 = vadd.f32 %v459, %v568
        %v570 = vpop.f32.mrf.mxu0
        %571 = vmatprep.mubr.bf16.mxu0 0
        %572 = vmatmul.mubr.bf16.gmra.mxu0 %v499
        %v573 = vpop.f32.mrf.mxu0
        %v574 = vadd.f32 %v459, %v573
        %v575 = vpop.f32.mrf.mxu0
        %v576 = vpop.f32.mrf.mxu0
        %v577 = vadd.f32 %v459, %v576
        %v578 = vpop.f32.mrf.mxu0
        %579 = vmatprep.mubr.bf16.mxu0 0
        %580 = vmatmul.mubr.bf16.gmra.mxu0 %v502
        %v581 = vpop.f32.mrf.mxu0
        %v582 = vadd.f32 %v459, %v581
        %v583 = vpop.f32.mrf.mxu0
        %v584 = vpop.f32.mrf.mxu0
        %v585 = vadd.f32 %v459, %v584
        %v586 = vpop.f32.mrf.mxu0
        %587 = vmatprep.mubr.bf16.mxu0 0
        %588 = vmatmul.mubr.bf16.gmra.mxu0 %v505
        %v589 = vpop.f32.mrf.mxu0
        %v590 = vadd.f32 %v459, %v589
        %v591 = vpop.f32.mrf.mxu0
        %v592 = vpop.f32.mrf.mxu0
        %v593 = vpop.f32.mrf.mxu0
        %594 = vdwg.mxu0
        %vm595 = vcmask 130048
        %v596 = vsel %vm595, %v542, -inf
        %597 = vmax.xlane.f32.xlu0 %v596
        %v598 = vpop.xlane.xlu0 %597
        %v599 = vsel %vm595, %v545, -inf
        %600 = vmax.xlane.f32.xlu0 %v599
        %v601 = vpop.xlane.xlu0 %600
        %v602 = vsel %vm595, %v550, -inf
        %603 = vmax.xlane.f32.xlu0 %v602
        %v604 = vpop.xlane.xlu0 %603
        %v605 = vsel %vm595, %v553, -inf
        %606 = vmax.xlane.f32.xlu0 %v605
        %v607 = vpop.xlane.xlu0 %606
        %v608 = vsel %vm595, %v558, -inf
        %609 = vmax.xlane.f32.xlu0 %v608
        %v610 = vpop.xlane.xlu0 %609
        %v611 = vsel %vm595, %v561, -inf
        %612 = vmax.xlane.f32.xlu0 %v611
        %v613 = vpop.xlane.xlu0 %612
        %v614 = vsel %vm595, %v566, -inf
        %615 = vmax.xlane.f32.xlu0 %v614
        %v616 = vpop.xlane.xlu0 %615
        %v617 = vsel %vm595, %v569, -inf
        %618 = vmax.xlane.f32.xlu0 %v617
        %v619 = vpop.xlane.xlu0 %618
        %v620 = vsel %vm595, %v574, -inf
        %621 = vmax.xlane.f32.xlu0 %v620
        %v622 = vpop.xlane.xlu0 %621
        %v623 = vsel %vm595, %v577, -inf
        %624 = vmax.xlane.f32.xlu0 %v623
        %v625 = vpop.xlane.xlu0 %624
        %v626 = vsel %vm595, %v582, -inf
        %627 = vmax.xlane.f32.xlu0 %v626
        %v628 = vpop.xlane.xlu0 %627
        %v629 = vsel %vm595, %v585, -inf
        %630 = vmax.xlane.f32.xlu0 %v629
        %v631 = vpop.xlane.xlu0 %630
        %v632 = vsel %vm595, %v590, -inf
        %633 = vmax.xlane.f32.xlu0 %v632
        %v634 = vpop.xlane.xlu0 %633
        %v635 = vsub.f32 %v542, %v598
        %v636 = vsub.f32 %v545, %v601
        %v637 = vsub.f32 %v550, %v604
        %v638 = vsub.f32 %v553, %v607
        %v639 = vsub.f32 %v558, %v610
        %v640 = vsub.f32 %v561, %v613
        %v641 = vsub.f32 %v566, %v616
        %v642 = vsub.f32 %v569, %v619
        %v643 = vsub.f32 %v574, %v622
        %v644 = vsub.f32 %v577, %v625
        %v645 = vsub.f32 %v582, %v628
        %v646 = vsub.f32 %v585, %v631
        %v647 = vsub.f32 %v590, %v634
        %v648 = vmul.f32 %v635, 1.442695
        %v649 = vpow.pop %v648
        %v650 = vmul.f32 %v636, 1.442695
        %v651 = vpow.pop %v650
        %v652 = vmul.f32 %v637, 1.442695
        %v653 = vpow.pop %v652
        %v654 = vmul.f32 %v638, 1.442695
        %v655 = vpow.pop %v654
        %v656 = vmul.f32 %v639, 1.442695
        %v657 = vpow.pop %v656
        %v658 = vmul.f32 %v640, 1.442695
        %v659 = vpow.pop %v658
        %v660 = vmul.f32 %v641, 1.442695
        %v661 = vpow.pop %v660
        %v662 = vmul.f32 %v642, 1.442695
        %v663 = vpow.pop %v662
        %v664 = vmul.f32 %v643, 1.442695
        %v665 = vpow.pop %v664
        %v666 = vmul.f32 %v644, 1.442695
        %v667 = vpow.pop %v666
        %v668 = vmul.f32 %v645, 1.442695
        %v669 = vpow.pop %v668
        %v670 = vmul.f32 %v646, 1.442695
        %v671 = vpow.pop %v670
        %v672 = vmul.f32 %v647, 1.442695
        %v673 = vpow.pop %v672
        %v674 = vsel %vm595, %v649, 0.0
        %675 = vadd.xlane.f32.xlu0 %v674
        %v676 = vpop.xlane.xlu0 %675
        %v677 = vsel %vm595, %v651, 0.0
        %678 = vadd.xlane.f32.xlu0 %v677
        %v679 = vpop.xlane.xlu0 %678
        %v680 = vsel %vm595, %v653, 0.0
        %681 = vadd.xlane.f32.xlu0 %v680
        %v682 = vpop.xlane.xlu0 %681
        %v683 = vsel %vm595, %v655, 0.0
        %684 = vadd.xlane.f32.xlu0 %v683
        %v685 = vpop.xlane.xlu0 %684
        %v686 = vsel %vm595, %v657, 0.0
        %687 = vadd.xlane.f32.xlu0 %v686
        %v688 = vpop.xlane.xlu0 %687
        %v689 = vsel %vm595, %v659, 0.0
        %690 = vadd.xlane.f32.xlu0 %v689
        %v691 = vpop.xlane.xlu0 %690
        %v692 = vsel %vm595, %v661, 0.0
        %693 = vadd.xlane.f32.xlu0 %v692
        %v694 = vpop.xlane.xlu0 %693
        %v695 = vsel %vm595, %v663, 0.0
        %696 = vadd.xlane.f32.xlu0 %v695
        %v697 = vpop.xlane.xlu0 %696
        %v698 = vsel %vm595, %v665, 0.0
        %699 = vadd.xlane.f32.xlu0 %v698
        %v700 = vpop.xlane.xlu0 %699
        %v701 = vsel %vm595, %v667, 0.0
        %702 = vadd.xlane.f32.xlu0 %v701
        %v703 = vpop.xlane.xlu0 %702
        %v704 = vsel %vm595, %v669, 0.0
        %705 = vadd.xlane.f32.xlu0 %v704
        %v706 = vpop.xlane.xlu0 %705
        %v707 = vsel %vm595, %v671, 0.0
        %708 = vadd.xlane.f32.xlu0 %v707
        %v709 = vpop.xlane.xlu0 %708
        %v710 = vsel %vm595, %v673, 0.0
        %711 = vadd.xlane.f32.xlu0 %v710
        %v712 = vpop.xlane.xlu0 %711
        %v713 = vrcp.pop %v676
        %v714 = vmul.f32 %v649, %v713
        %v715 = vrcp.pop %v679
        %v716 = vmul.f32 %v651, %v715
        %v717 = vrcp.pop %v682
        %v718 = vmul.f32 %v653, %v717
        %v719 = vrcp.pop %v685
        %v720 = vmul.f32 %v655, %v719
        %v721 = vrcp.pop %v688
        %v722 = vmul.f32 %v657, %v721
        %v723 = vrcp.pop %v691
        %v724 = vmul.f32 %v659, %v723
        %v725 = vrcp.pop %v694
        %v726 = vmul.f32 %v661, %v725
        %v727 = vrcp.pop %v697
        %v728 = vmul.f32 %v663, %v727
        %v729 = vrcp.pop %v700
        %v730 = vmul.f32 %v665, %v729
        %v731 = vrcp.pop %v703
        %v732 = vmul.f32 %v667, %v731
        %v733 = vrcp.pop %v706
        %v734 = vmul.f32 %v669, %v733
        %v735 = vrcp.pop %v709
        %v736 = vmul.f32 %v671, %v735
        %v737 = vrcp.pop %v712
        %v738 = vmul.f32 %v673, %v737
        %739 = vst.msk [vmem:[%s226] sm:$0xff] %vm595, %v714
        %740 = vst.msk [vmem:[%s226 + $0x8] sm:$0xff] %vm595, %v716
        %741 = vst.msk [vmem:[%s226 + $0x10] sm:$0xff] %vm595, %v718
        %742 = vst.msk [vmem:[%s226 + $0x18] sm:$0xff] %vm595, %v720
        %743 = vst.msk [vmem:[%s226 + $0x20] sm:$0xff] %vm595, %v722
        %744 = vst.msk [vmem:[%s226 + $0x28] sm:$0xff] %vm595, %v724
        %745 = vst.msk [vmem:[%s226 + $0x30] sm:$0xff] %vm595, %v726
        %746 = vst.msk [vmem:[%s226 + $0x38] sm:$0xff] %vm595, %v728
        %747 = vst.msk [vmem:[%s226 + $0x40] sm:$0xff] %vm595, %v730
        %748 = vst.msk [vmem:[%s226 + $0x48] sm:$0xff] %vm595, %v732
        %749 = vst.msk [vmem:[%s226 + $0x50] sm:$0xff] %vm595, %v734
        %750 = vst.msk [vmem:[%s226 + $0x58] sm:$0xff] %vm595, %v736
        %751 = vst.msk [vmem:[%s226 + $0x60] sm:$0xff] %vm595, %v738
        %s752 = sand.u32 %s134, 1
        %s753 = sand.u32 %s134, 1
        %s754 = smul.addr %s753, 104
        %s755 = scalar_lea.vmem [#allocation2], %s754
        // Predicated region
        $region41: #{tpu_custom_call.1} parent=39 // pred_check
          %p756 = pneg %p144
        $region42: #{tpu_custom_call.1} parent=39 // pred_check_branch
          %758 = sbr.rel (%p756) target = $region44
        $region43: #{tpu_custom_call.1} parent=39 // pred_region
          %s759 = smul.u32 13, %s16
          %s760 = ssub.s32 25, %s759
          %p761 = scmp.lt.s32.totalorder %s760, 13
          %s762 = scalar_select %p761, %s760, 13
          %s763 = smul.u32 128, %s762
          %p764 = scmp.ne.s32.totalorder 0, %s763
          %s765 = smul.addr %s759, 8
          %s766 = scalar_lea.vmem %s5, %s765
          // Predicated region
          $region45: #{tpu_custom_call.1} parent=43 // pred_check
            %p767 = pneg %p764
          $region46: #{tpu_custom_call.1} parent=43 // pred_check_branch
            %769 = sbr.rel (%p767) target = $region48
          $region47: #{tpu_custom_call.1} parent=43 // pred_region
            // Predicated region
            $region49: #{tpu_custom_call.1} parent=47 // pred_check
              _
            $region50: #{tpu_custom_call.1} parent=47 // pred_check_branch
              %771 = sbr.rel (0) target = $region52
            $region51: #{tpu_custom_call.1} parent=47 // pred_region
              // Predicated region
              $region71: #{tpu_custom_call.1} parent=51 // pred_check
                _
              $region72: #{tpu_custom_call.1} parent=51 // pred_check_branch
                %846 = sbr.rel (0) target = $region74
              $region73: #{tpu_custom_call.1} parent=51 // pred_region
                %s847 = sdiv.u32.pop %s762, 13
                %s848 = srem.u32.pop %s762, 13
                // While loop
                $region75: #{tpu_custom_call.1} parent=73 // loop_pre_header
                  _
                $region76: #{tpu_custom_call.1} parent=73 // loop_header
                  %s850 = sphi 0, %s852
                  %p851 = scmp.ge.s32.totalorder %s850, %s847
                  %s855 = sphi 0, %s886
                  %s856 = sphi %s755, %s889
                  %s857 = sphi %s766, %s890
                $region77: #{tpu_custom_call.1} parent=73 // loop_header_branch
                  %854 = sbr.rel (%p851) target = $region81
                $region78: #{tpu_custom_call.1} parent=73 // loop_body
                  %v858 = vld [vmem:[%s856] sm:$0xff]
                  %859 = vst [vmem:[%s857] sm:$0xff] %v858
                  %v860 = vld [vmem:[%s856 + $0x8] sm:$0xff]
                  %861 = vst [vmem:[%s857 + $0x8] sm:$0xff] %v860
                  %v862 = vld [vmem:[%s856 + $0x10] sm:$0xff]
                  %863 = vst [vmem:[%s857 + $0x10] sm:$0xff] %v862
                  %v864 = vld [vmem:[%s856 + $0x18] sm:$0xff]
                  %865 = vst [vmem:[%s857 + $0x18] sm:$0xff] %v864
                  %v866 = vld [vmem:[%s856 + $0x20] sm:$0xff]
                  %867 = vst [vmem:[%s857 + $0x20] sm:$0xff] %v866
                  %v868 = vld [vmem:[%s856 + $0x28] sm:$0xff]
                  %869 = vst [vmem:[%s857 + $0x28] sm:$0xff] %v868
                  %v870 = vld [vmem:[%s856 + $0x30] sm:$0xff]
                  %871 = vst [vmem:[%s857 + $0x30] sm:$0xff] %v870
                  %v872 = vld [vmem:[%s856 + $0x38] sm:$0xff]
                  %873 = vst [vmem:[%s857 + $0x38] sm:$0xff] %v872
                  %v874 = vld [vmem:[%s856 + $0x40] sm:$0xff]
                  %875 = vst [vmem:[%s857 + $0x40] sm:$0xff] %v874
                  %v876 = vld [vmem:[%s856 + $0x48] sm:$0xff]
                  %877 = vst [vmem:[%s857 + $0x48] sm:$0xff] %v876
                  %v878 = vld [vmem:[%s856 + $0x50] sm:$0xff]
                  %879 = vst [vmem:[%s857 + $0x50] sm:$0xff] %v878
                  %v880 = vld [vmem:[%s856 + $0x58] sm:$0xff]
                  %881 = vst [vmem:[%s857 + $0x58] sm:$0xff] %v880
                  %v882 = vld [vmem:[%s856 + $0x60] sm:$0xff]
                  %883 = vst [vmem:[%s857 + $0x60] sm:$0xff] %v882
                  %s884 = sadd.s32 1, %s855
                  %p885 = scmp.ge.s32.totalorder %s884, %s847
                  %s886 = scalar_select %p885, 0, %s884
                  %s887 = smul.u32 %s886, 104
                  %s888 = smul.u32 %s886, 104
                  %s889 = scalar_lea.vmem %s755, %s887 [#allocation2]
                  %s890 = scalar_lea.vmem %s766, %s888
                $region79: #{tpu_custom_call.1} parent=73 // loop_footer
                  %s852 = sadd.s32 %s850, 1
                $region80: #{tpu_custom_call.1} parent=73 // loop_footer_branch
                  %849 = sbr.rel target = $region76
                $region81: #{tpu_custom_call.1} parent=73 // loop_exit
                  _
                %s891 = sdiv.u32.pop %s762, 13
                %s892 = srem.u32.pop %s762, 13
                %s893 = smul.u32 %s891, 13
                %s894 = smul.u32 8, %s893
                %s895 = scalar_lea.vmem %s755, %s894 [#allocation2]
                %s896 = smul.u32 8, %s893
                %s897 = scalar_lea.vmem %s766, %s896
                // While loop
                $region82: #{tpu_custom_call.1} parent=73 // loop_pre_header
                  _
                $region83: #{tpu_custom_call.1} parent=73 // loop_header
                  %s899 = sphi 0, %s901
                  %p900 = scmp.ge.s32.totalorder %s899, %s892
                  %s904 = sphi 0, %s911
                  %s905 = sphi %s895, %s914
                  %s906 = sphi %s897, %s915
                $region84: #{tpu_custom_call.1} parent=73 // loop_header_branch
                  %903 = sbr.rel (%p900) target = $region88
                $region85: #{tpu_custom_call.1} parent=73 // loop_body
                  %v907 = vld [vmem:[%s905] sm:$0xff]
                  %908 = vst [vmem:[%s906] sm:$0xff] %v907
                  %s909 = sadd.s32 1, %s904
                  %p910 = scmp.ge.s32.totalorder %s909, %s892
                  %s911 = scalar_select %p910, 0, %s909
                  %s912 = smul.u32 %s911, 8
                  %s913 = smul.u32 %s911, 8
                  %s914 = scalar_lea.vmem %s895, %s912 [#allocation2]
                  %s915 = scalar_lea.vmem %s897, %s913
                $region86: #{tpu_custom_call.1} parent=73 // loop_footer
                  %s901 = sadd.s32 %s899, 1
                $region87: #{tpu_custom_call.1} parent=73 // loop_footer_branch
                  %898 = sbr.rel target = $region83
                $region88: #{tpu_custom_call.1} parent=73 // loop_exit
                  _
              $region74: #{tpu_custom_call.1} parent=51 // pred_fallthru
                _
              // Predicated region
              $region89: #{tpu_custom_call.1} parent=51 // pred_check
                _
              $region90: #{tpu_custom_call.1} parent=51 // pred_check_branch
                %917 = sbr.rel target = $region92
              $region91: #{tpu_custom_call.1} parent=51 // pred_region
                _
              $region92: #{tpu_custom_call.1} parent=51 // pred_fallthru
                _
            $region52: #{tpu_custom_call.1} parent=47 // pred_fallthru
              _
            // Predicated region
            $region53: #{tpu_custom_call.1} parent=47 // pred_check
              _
            $region54: #{tpu_custom_call.1} parent=47 // pred_check_branch
              %773 = sbr.rel target = $region56
            $region55: #{tpu_custom_call.1} parent=47 // pred_region
              %s775 = ssub.s32 256, 1
              %s776 = sdiv.u32.pop %s762, 13
              %s777 = srem.u32.pop %s762, 13
              // While loop
              $region57: #{tpu_custom_call.1} parent=55 // loop_pre_header
                _
              $region58: #{tpu_custom_call.1} parent=55 // loop_header
                %s779 = sphi 0, %s781
                %p780 = scmp.ge.s32.totalorder %s779, %s776
                %s784 = sphi 0, %s815
                %s785 = sphi %s755, %s818
                %s786 = sphi %s766, %s819
              $region59: #{tpu_custom_call.1} parent=55 // loop_header_branch
                %783 = sbr.rel (%p780) target = $region63
              $region60: #{tpu_custom_call.1} parent=55 // loop_body
                %v787 = vld [vmem:[%s785] sm:%s775]
                %788 = vst [vmem:[%s786] sm:%s775] %v787
                %v789 = vld [vmem:[%s785 + $0x8] sm:%s775]
                %790 = vst [vmem:[%s786 + $0x8] sm:%s775] %v789
                %v791 = vld [vmem:[%s785 + $0x10] sm:%s775]
                %792 = vst [vmem:[%s786 + $0x10] sm:%s775] %v791
                %v793 = vld [vmem:[%s785 + $0x18] sm:%s775]
                %794 = vst [vmem:[%s786 + $0x18] sm:%s775] %v793
                %v795 = vld [vmem:[%s785 + $0x20] sm:%s775]
                %796 = vst [vmem:[%s786 + $0x20] sm:%s775] %v795
                %v797 = vld [vmem:[%s785 + $0x28] sm:%s775]
                %798 = vst [vmem:[%s786 + $0x28] sm:%s775] %v797
                %v799 = vld [vmem:[%s785 + $0x30] sm:%s775]
                %800 = vst [vmem:[%s786 + $0x30] sm:%s775] %v799
                %v801 = vld [vmem:[%s785 + $0x38] sm:%s775]
                %802 = vst [vmem:[%s786 + $0x38] sm:%s775] %v801
                %v803 = vld [vmem:[%s785 + $0x40] sm:%s775]
                %804 = vst [vmem:[%s786 + $0x40] sm:%s775] %v803
                %v805 = vld [vmem:[%s785 + $0x48] sm:%s775]
                %806 = vst [vmem:[%s786 + $0x48] sm:%s775] %v805
                %v807 = vld [vmem:[%s785 + $0x50] sm:%s775]
                %808 = vst [vmem:[%s786 + $0x50] sm:%s775] %v807
                %v809 = vld [vmem:[%s785 + $0x58] sm:%s775]
                %810 = vst [vmem:[%s786 + $0x58] sm:%s775] %v809
                %v811 = vld [vmem:[%s785 + $0x60] sm:%s775]
                %812 = vst [vmem:[%s786 + $0x60] sm:%s775] %v811
                %s813 = sadd.s32 1, %s784
                %p814 = scmp.ge.s32.totalorder %s813, %s776
                %s815 = scalar_select %p814, 0, %s813
                %s816 = smul.u32 %s815, 104
                %s817 = smul.u32 %s815, 104
                %s818 = scalar_lea.vmem %s755, %s816 [#allocation2]
                %s819 = scalar_lea.vmem %s766, %s817
              $region61: #{tpu_custom_call.1} parent=55 // loop_footer
                %s781 = sadd.s32 %s779, 1
              $region62: #{tpu_custom_call.1} parent=55 // loop_footer_branch
                %778 = sbr.rel target = $region58
              $region63: #{tpu_custom_call.1} parent=55 // loop_exit
                _
              %s820 = sdiv.u32.pop %s762, 13
              %s821 = srem.u32.pop %s762, 13
              %s822 = smul.u32 %s820, 13
              %s823 = smul.u32 8, %s822
              %s824 = scalar_lea.vmem %s755, %s823 [#allocation2]
              %s825 = smul.u32 8, %s822
              %s826 = scalar_lea.vmem %s766, %s825
              // While loop
              $region64: #{tpu_custom_call.1} parent=55 // loop_pre_header
                _
              $region65: #{tpu_custom_call.1} parent=55 // loop_header
                %s828 = sphi 0, %s830
                %p829 = scmp.ge.s32.totalorder %s828, %s821
                %s833 = sphi 0, %s840
                %s834 = sphi %s824, %s843
                %s835 = sphi %s826, %s844
              $region66: #{tpu_custom_call.1} parent=55 // loop_header_branch
                %832 = sbr.rel (%p829) target = $region70
              $region67: #{tpu_custom_call.1} parent=55 // loop_body
                %v836 = vld [vmem:[%s834] sm:%s775]
                %837 = vst [vmem:[%s835] sm:%s775] %v836
                %s838 = sadd.s32 1, %s833
                %p839 = scmp.ge.s32.totalorder %s838, %s821
                %s840 = scalar_select %p839, 0, %s838
                %s841 = smul.u32 %s840, 8
                %s842 = smul.u32 %s840, 8
                %s843 = scalar_lea.vmem %s824, %s841 [#allocation2]
                %s844 = scalar_lea.vmem %s826, %s842
              $region68: #{tpu_custom_call.1} parent=55 // loop_footer
                %s830 = sadd.s32 %s828, 1
              $region69: #{tpu_custom_call.1} parent=55 // loop_footer_branch
                %827 = sbr.rel target = $region65
              $region70: #{tpu_custom_call.1} parent=55 // loop_exit
                _
            $region56: #{tpu_custom_call.1} parent=47 // pred_fallthru
              _
          $region48: #{tpu_custom_call.1} parent=43 // pred_fallthru
            _
          %918 = vnop
        $region44: #{tpu_custom_call.1} parent=39 // pred_fallthru
          _
      $region40: #{tpu_custom_call.1} parent=5 // pred_fallthru
        _
      %p919 = scmp.le.s32.totalorder 2, %s11
      // Predicated region
      $region93: #{tpu_custom_call.1} parent=5 // pred_check
        %p920 = pneg %p919
      $region94: #{tpu_custom_call.1} parent=5 // pred_check_branch
        %922 = sbr.rel (%p920) target = $region96
      $region95: #{tpu_custom_call.1} parent=5 // pred_region
        %s923 = ssub.s32 %s11, 2
        // Predicated region
        $region97: #{tpu_custom_call.1} parent=95 // pred_check
          %p924 = pneg %p150
        $region98: #{tpu_custom_call.1} parent=95 // pred_check_branch
          %926 = sbr.rel (%p924) target = $region100
        $region99: #{tpu_custom_call.1} parent=95 // pred_region
          %s927 = sand.u32 %s135, 1
          %s928 = sand.u32 %s135, 1
          %s929 = smul.addr %s928, 104
          %s930 = scalar_lea.vmem [#allocation2], %s929
        $region100: #{tpu_custom_call.1} parent=95 // pred_fallthru
          _
      $region96: #{tpu_custom_call.1} parent=5 // pred_fallthru
        _
    $region6: #{tpu_custom_call.1} parent=1 // loop_footer
      %s15 = sadd.s32 1, %s11
    $region7: #{tpu_custom_call.1} parent=1 // loop_footer_branch
      %10 = sbr.rel target = $region3
    $region8: #{tpu_custom_call.1} parent=1 // loop_exit
      _

</llo_original>
